<compile_context>
chip_gen: v7x
topology: tpu7x:2x2x1
jax: 0.10.0
libtpu: 0.0.40
codegen_flags: <defaults>
</compile_context>

<pallas_src>
import jax
import jax.numpy as jnp
from jax import lax
from jax.experimental import pallas as pl
from jax.experimental.pallas import tpu as pltpu

_MIB = 1024 * 1024


def _round_up(x, m):
    return (x + m - 1) // m * m


def _padded_tile_bytes(second_minor, minor, itemsize):
    """VMEM footprint of a 2D (second_minor, minor) slab under (8,128) tiling.

    Sub-32-bit dtypes pack along sublanes, so the sublane multiple grows."""
    sublane = 8 * max(1, 4 // itemsize)
    return _round_up(second_minor, sublane) * _round_up(minor, 128) * itemsize


def _per_core_vmem_bytes():
    try:
        cap = int(getattr(pltpu.get_tpu_info(), "vmem_capacity_bytes", 0))
        if cap > 0:
            return cap
    except Exception:
        pass
    return 64 * _MIB  # conservative fallback (v7x per-TensorCore VMEM)


def _plan(N, C, W, L, V, itemsize):
    """Pick the channel block cb, the channel grid extent, and vmem_limit_bytes."""
    cap = _per_core_vmem_bytes()
    # Generation-aware budget for the double-buffered working set:
    #   v5e/v6e (128 MiB VMEM) -> 48 MiB;  v7x (64 MiB per TC) -> 40 MiB.
    budget = min(48 * _MIB, int(cap * 0.625))

    a_bytes = _padded_tile_bytes(V, W, itemsize)
    per_c = 2 * (_padded_tile_bytes(W, L, itemsize) +
                 _padded_tile_bytes(V, L, itemsize))  # double-buffered in + out
    avail = max(budget - 2 * a_bytes, per_c)
    cb = int(max(1, min(C, avail // per_c)))

    # Rebalance so channel blocks are near-equal (avoids a tiny ragged tail),
    # and keep >= 2 parallel steps when N == 1 so both v7x TensorCores get work.
    nblocks = pl.cdiv(C, cb)
    if N == 1:
        nblocks = max(nblocks, min(C, 2))
    cb = pl.cdiv(C, nblocks)

    x_blk = cb * _padded_tile_bytes(W, L, itemsize)
    o_blk = cb * _padded_tile_bytes(V, L, itemsize)
    footprint = 2 * (x_blk + o_blk) + 2 * a_bytes + 2 * _MIB  # + headroom
    vmem_limit = int(min(int(cap * 0.9), max(footprint, 32 * _MIB)))
    return int(cb), int(nblocks), vmem_limit


def _nconv_kernel(x_ref, a_ref, o_ref):
    # x_ref: (1, Cb, W, L), a_ref: (V, W), o_ref: (1, Cb, V, L)
    cb = x_ref.shape[1]

    def one(c):
        # Re-read A from VMEM per dot (cheap) instead of keeping a padded
        # (V, W) value live across a deep unroll -> no vreg spills.
        o_ref[0, c] = jnp.dot(
            a_ref[...], x_ref[0, c], preferred_element_type=jnp.float32
        ).astype(o_ref.dtype)

    if cb <= 8:
        for c in range(cb):          # short static unroll
            one(c)
    else:
        def body(c, carry):
            one(c)
            return carry
        lax.fori_loop(0, cb, body, None, unroll=8)


def nconv(x, A):
    """Pallas equivalent of torch.einsum('ncwl,vw->ncvl', (x, A)).contiguous().

    Works for float32 or bfloat16 inputs (bf16 halves HBM traffic for this
    bandwidth-bound op — preferred on v5e); accumulation is always f32.
    """
    N, C, W, L = x.shape
    V, W2 = A.shape
    assert W == W2, "contraction dim mismatch"
    assert x.dtype == A.dtype, "x and A must share a dtype"

    itemsize = jnp.dtype(x.dtype).itemsize
    cb, nblocks, vmem_limit = _plan(N, C, W, L, V, itemsize)

    cost = pl.CostEstimate(
        flops=2 * N * C * V * W * L,
        transcendentals=0,
        bytes_accessed=itemsize * (N * C * W * L + N * C * V * L + V * W),
    )

    return pl.pallas_call(
        _nconv_kernel,
        out_shape=jax.ShapeDtypeStruct((N, C, V, L), x.dtype),
        grid_spec=pltpu.PrefetchScalarGridSpec(
            num_scalar_prefetch=0,
            grid=(N, nblocks),
            in_specs=[
                # one fat (Cb, W, L) channel slab of x per grid step
                pl.BlockSpec((1, cb, W, L), lambda n, cblk: (n, cblk, 0, 0)),
                # A is tiny and reused at every step -> constant index_map,
                # DMA'd once and VMEM-resident across the whole grid
                pl.BlockSpec((V, W), lambda n, cblk: (0, 0)),
            ],
            out_specs=pl.BlockSpec((1, cb, V, L), lambda n, cblk: (n, cblk, 0, 0)),
        ),
        compiler_params=pltpu.CompilerParams(
            # no cross-step reduction -> both axes parallel (megacore sharding)
            dimension_semantics=("parallel", "parallel"),
            vmem_limit_bytes=vmem_limit,
        ),
        cost_estimate=cost,
    )(x, A)


if __name__ == "__main__":
    key = jax.random.PRNGKey(0)
    kx, ka = jax.random.split(key)

    # small shapes consistent with 'ncwl' / 'vw'
    N, C, W, L, V = 2, 4, 16, 16, 16
    x = jax.random.normal(kx, (N, C, W, L), dtype=jnp.float32)
    A = jax.random.normal(ka, (V, W), dtype=jnp.float32)

    # f32 path
    out = jax.block_until_ready(nconv(x, A))
    ref = jnp.einsum('ncwl,vw->ncvl', x, A)
    assert out.shape == (N, C, V, L)
    assert jnp.allclose(out, ref, atol=1e-5, rtol=1e-5)

    # bf16 path (halves HBM read/write traffic; f32 accumulation inside)
    out_bf16 = jax.block_until_ready(
        nconv(x.astype(jnp.bfloat16), A.astype(jnp.bfloat16)))
    assert out_bf16.dtype == jnp.bfloat16
    assert jnp.allclose(out_bf16.astype(jnp.float32), ref, atol=2e-1, rtol=5e-2)

    # N == 1 path: channel axis must split into >= 2 parallel blocks (v7x megacore)
    x1 = jax.random.normal(kx, (1, 6, W, L), dtype=jnp.float32)
    out1 = jax.block_until_ready(nconv(x1, A))
    ref1 = jnp.einsum('ncwl,vw->ncvl', x1, A)
    assert jnp.allclose(out1, ref1, atol=1e-5, rtol=1e-5)

    print("KERNEL_OK")
</pallas_src>

<mosaic_0001>
module attributes {stable_mosaic.version = 11 : i64} {
  func.func @_nconv_kernel(%arg0: i32, %arg1: i32, %arg2: memref<1x4x16x16xf32, #tpu.memory_space<vmem>>, %arg3: memref<16x16xf32, #tpu.memory_space<vmem>>, %arg4: memref<1x4x16x16xf32, #tpu.memory_space<vmem>>) attributes {dimension_semantics = [#tpu.dimension_semantics<parallel>, #tpu.dimension_semantics<parallel>], iteration_bounds = array<i64: 2, 1>, scalar_prefetch = 0 : i64, scratch_operands = 0 : i64, tpu.core_type = #tpu.core_type<tc>, window_params = [{transform_indices = @transform_0, window_bounds = array<i64: 1, 4, 16, 16>}, {pipeline_mode = #tpu.pipeline_mode<synchronous>, transform_indices = @transform_1, window_bounds = array<i64: 16, 16>}, {transform_indices = @transform_2, window_bounds = array<i64: 1, 4, 16, 16>}]} {
    %c0 = arith.constant 0 : index
    %c0_0 = arith.constant 0 : index
    %0 = vector.load %arg3[%c0, %c0_0] : memref<16x16xf32, #tpu.memory_space<vmem>>, vector<16x16xf32>
    %c0_1 = arith.constant 0 : index
    %c0_2 = arith.constant 0 : index
    %c0_3 = arith.constant 0 : index
    %c0_4 = arith.constant 0 : index
    %1 = vector.load %arg2[%c0_1, %c0_2, %c0_3, %c0_4] : memref<1x4x16x16xf32, #tpu.memory_space<vmem>>, vector<1x1x16x16xf32>
    %2 = vector.shape_cast %1 : vector<1x1x16x16xf32> to vector<16x16xf32>
    %cst = arith.constant dense<0.000000e+00> : vector<16x16xf32>
    %3 = tpu.matmul %0, %2, %cst {dimension_numbers = #tpu.dot_dimension_numbers<[1], [0], [0], [1], [0, 0, 1, 1], [], []>} : vector<16x16xf32>, vector<16x16xf32>, vector<16x16xf32> -> vector<16x16xf32>
    %c0_5 = arith.constant 0 : index
    %c0_6 = arith.constant 0 : index
    %c0_7 = arith.constant 0 : index
    %c0_8 = arith.constant 0 : index
    %4 = vector.load %arg4[%c0_5, %c0_6, %c0_7, %c0_8] : memref<1x4x16x16xf32, #tpu.memory_space<vmem>>, vector<1x1x16x16xf32>
    %5 = vector.shape_cast %4 : vector<1x1x16x16xf32> to vector<16x16xf32>
    %6 = vector.shape_cast %3 : vector<16x16xf32> to vector<1x1x16x16xf32>
    tpu.vector_store %arg4[%c0_5, %c0_6, %c0_7, %c0_8], %6 {strides = array<i32>} : memref<1x4x16x16xf32, #tpu.memory_space<vmem>>, vector<1x1x16x16xf32>,
    %c0_9 = arith.constant 0 : index
    %c0_10 = arith.constant 0 : index
    %7 = vector.load %arg3[%c0_9, %c0_10] : memref<16x16xf32, #tpu.memory_space<vmem>>, vector<16x16xf32>
    %c0_11 = arith.constant 0 : index
    %c1 = arith.constant 1 : index
    %c0_12 = arith.constant 0 : index
    %c0_13 = arith.constant 0 : index
    %8 = vector.load %arg2[%c0_11, %c1, %c0_12, %c0_13] : memref<1x4x16x16xf32, #tpu.memory_space<vmem>>, vector<1x1x16x16xf32>
    %9 = vector.shape_cast %8 : vector<1x1x16x16xf32> to vector<16x16xf32>
    %cst_14 = arith.constant dense<0.000000e+00> : vector<16x16xf32>
    %10 = tpu.matmul %7, %9, %cst_14 {dimension_numbers = #tpu.dot_dimension_numbers<[1], [0], [0], [1], [0, 0, 1, 1], [], []>} : vector<16x16xf32>, vector<16x16xf32>, vector<16x16xf32> -> vector<16x16xf32>
    %c0_15 = arith.constant 0 : index
    %c1_16 = arith.constant 1 : index
    %c0_17 = arith.constant 0 : index
    %c0_18 = arith.constant 0 : index
    %11 = vector.load %arg4[%c0_15, %c1_16, %c0_17, %c0_18] : memref<1x4x16x16xf32, #tpu.memory_space<vmem>>, vector<1x1x16x16xf32>
    %12 = vector.shape_cast %11 : vector<1x1x16x16xf32> to vector<16x16xf32>
    %13 = vector.shape_cast %10 : vector<16x16xf32> to vector<1x1x16x16xf32>
    tpu.vector_store %arg4[%c0_15, %c1_16, %c0_17, %c0_18], %13 {strides = array<i32>} : memref<1x4x16x16xf32, #tpu.memory_space<vmem>>, vector<1x1x16x16xf32>,
    %c0_19 = arith.constant 0 : index
    %c0_20 = arith.constant 0 : index
    %14 = vector.load %arg3[%c0_19, %c0_20] : memref<16x16xf32, #tpu.memory_space<vmem>>, vector<16x16xf32>
    %c0_21 = arith.constant 0 : index
    %c2 = arith.constant 2 : index
    %c0_22 = arith.constant 0 : index
    %c0_23 = arith.constant 0 : index
    %15 = vector.load %arg2[%c0_21, %c2, %c0_22, %c0_23] : memref<1x4x16x16xf32, #tpu.memory_space<vmem>>, vector<1x1x16x16xf32>
    %16 = vector.shape_cast %15 : vector<1x1x16x16xf32> to vector<16x16xf32>
    %cst_24 = arith.constant dense<0.000000e+00> : vector<16x16xf32>
    %17 = tpu.matmul %14, %16, %cst_24 {dimension_numbers = #tpu.dot_dimension_numbers<[1], [0], [0], [1], [0, 0, 1, 1], [], []>} : vector<16x16xf32>, vector<16x16xf32>, vector<16x16xf32> -> vector<16x16xf32>
    %c0_25 = arith.constant 0 : index
    %c2_26 = arith.constant 2 : index
    %c0_27 = arith.constant 0 : index
    %c0_28 = arith.constant 0 : index
    %18 = vector.load %arg4[%c0_25, %c2_26, %c0_27, %c0_28] : memref<1x4x16x16xf32, #tpu.memory_space<vmem>>, vector<1x1x16x16xf32>
    %19 = vector.shape_cast %18 : vector<1x1x16x16xf32> to vector<16x16xf32>
    %20 = vector.shape_cast %17 : vector<16x16xf32> to vector<1x1x16x16xf32>
    tpu.vector_store %arg4[%c0_25, %c2_26, %c0_27, %c0_28], %20 {strides = array<i32>} : memref<1x4x16x16xf32, #tpu.memory_space<vmem>>, vector<1x1x16x16xf32>,
    %c0_29 = arith.constant 0 : index
    %c0_30 = arith.constant 0 : index
    %21 = vector.load %arg3[%c0_29, %c0_30] : memref<16x16xf32, #tpu.memory_space<vmem>>, vector<16x16xf32>
    %c0_31 = arith.constant 0 : index
    %c3 = arith.constant 3 : index
    %c0_32 = arith.constant 0 : index
    %c0_33 = arith.constant 0 : index
    %22 = vector.load %arg2[%c0_31, %c3, %c0_32, %c0_33] : memref<1x4x16x16xf32, #tpu.memory_space<vmem>>, vector<1x1x16x16xf32>
    %23 = vector.shape_cast %22 : vector<1x1x16x16xf32> to vector<16x16xf32>
    %cst_34 = arith.constant dense<0.000000e+00> : vector<16x16xf32>
    %24 = tpu.matmul %21, %23, %cst_34 {dimension_numbers = #tpu.dot_dimension_numbers<[1], [0], [0], [1], [0, 0, 1, 1], [], []>} : vector<16x16xf32>, vector<16x16xf32>, vector<16x16xf32> -> vector<16x16xf32>
    %c0_35 = arith.constant 0 : index
    %c3_36 = arith.constant 3 : index
    %c0_37 = arith.constant 0 : index
    %c0_38 = arith.constant 0 : index
    %25 = vector.load %arg4[%c0_35, %c3_36, %c0_37, %c0_38] : memref<1x4x16x16xf32, #tpu.memory_space<vmem>>, vector<1x1x16x16xf32>
    %26 = vector.shape_cast %25 : vector<1x1x16x16xf32> to vector<16x16xf32>
    %27 = vector.shape_cast %24 : vector<16x16xf32> to vector<1x1x16x16xf32>
    tpu.vector_store %arg4[%c0_35, %c3_36, %c0_37, %c0_38], %27 {strides = array<i32>} : memref<1x4x16x16xf32, #tpu.memory_space<vmem>>, vector<1x1x16x16xf32>,
    return
  }
  func.func @transform_0(%arg0: i32, %arg1: i32) -> (i32, i32, i32, i32) {
    %c0_i32 = arith.constant 0 : i32
    %c0_i32_0 = arith.constant 0 : i32
    %c0_i32_1 = arith.constant 0 : i32
    return %arg0, %arg1, %c0_i32, %c0_i32_0 : i32, i32, i32, i32
  }
  func.func @transform_1(%arg0: i32, %arg1: i32) -> (i32, i32) {
    %c0_i32 = arith.constant 0 : i32
    %c0_i32_0 = arith.constant 0 : i32
    %c0_i32_1 = arith.constant 0 : i32
    return %c0_i32, %c0_i32_0 : i32, i32
  }
  func.func @transform_2(%arg0: i32, %arg1: i32) -> (i32, i32, i32, i32) {
    %c0_i32 = arith.constant 0 : i32
    %c0_i32_0 = arith.constant 0 : i32
    %c0_i32_1 = arith.constant 0 : i32
    return %arg0, %arg1, %c0_i32, %c0_i32_0 : i32, i32, i32, i32
  }
}

</mosaic_0001>

<llo_original>
// kernel: tpu_custom_call.1
$region0: #{tpu_custom_call.1}
  #allocation0 [shape = 'u32[]', space=smem, size = 0x4, offset = 0x4, fixed_abs, tag = 'smem constant byte address 0x4 - core index']
  #allocation1 [shape = 'u32[144,128]{1,0:T(1,128)}', space=vmem, size = 0x12000, scoped, tag = 'internal scratch']
  %s0 = inlined_call_operand.hbm [shape: f32[2,4,16,16], index: 0, kind: input, shape index: {}]
  %s1 = inlined_call_operand.hbm [shape: f32[16,16], index: 1, kind: input, shape index: {}]
  %s2 = inlined_call_operand.hbm [shape: f32[2,4,16,16], index: 2, kind: output, shape index: {}]
  %s3 = sld [smem:[#allocation0]]
  $region49: #{tpu_custom_call.1} parent=0
    _
  %s5 = ssub.s32 1, %s3
  %s6 = scalar_select 0, %s5, %s3
  $region1: #{tpu_custom_call.1} parent=0
    #allocation2 [shape = 'u8[65536]{0}', space=vmem, size = 0x10000, scoped, tag = 'input window, operand 0']
    #allocation3 [shape = 's32[2]{0}', space=sflag, size = 0x8, scoped, tag = 'scoped memory for tpu_custom_call.1']
    #allocation4 [shape = 's32[2]{0}', space=sflag, size = 0x8, scoped, tag = 'scoped memory for tpu_custom_call.1']
    #allocation5 [shape = 'u8[8192]{0}', space=vmem, size = 0x2000, scoped, tag = 'input window, operand 1, single buffered']
    #allocation6 [shape = 's32[1]{0}', space=sflag, size = 0x4, scoped, tag = 'scoped memory for tpu_custom_call.1']
    #allocation7 [shape = 'u8[65536]{0}', space=vmem, size = 0x10000, scoped, tag = 'output window, operand 0']
    %7 = vsyncpa [#allocation3], 0
    %s8 = scalar_lea.sflag [#allocation3], 1
    %9 = vsyncpa %s8, 0
    %10 = vsyncpa [#allocation6], 0
    %11 = vsyncpa [#allocation4], 0
    %s12 = scalar_lea.sflag [#allocation4], 1
    %13 = vsyncpa %s12, 0
    loop: start=0, step=1, limit=4
    $region2: #{tpu_custom_call.1} parent=1 // loop_pre_header
      _
    $region3: #{tpu_custom_call.1} parent=1 // loop_header
      %s15 = sphi 0, %s19
      %p16 = scmp.ge.s32.totalorder %s15, 4
      %s22 = sphi 0, %s34
      %s23 = sphi 0, %s30
      %s24 = sphi 0, %s22
      %s25 = sphi 0, %s23
      %s26 = sphi 0, %s24
      %s27 = sphi 0, %s25
      %s39 = sphi 0, %s41
      %s42 = sphi 0, %s39
      %s43 = sphi 0, %s42
      %s59 = sphi 0, %s43
      %s63 = sphi 0, %s63
      %s65 = sphi 0, %s63
      %s66 = sphi 0, %s65
      %s80 = sphi 0, %s66
      %s88 = sphi 0, %s90
      %s91 = sphi 0, %s88
      %s92 = sphi 0, %s91
      %s108 = sphi 0, %s92
    $region4: #{tpu_custom_call.1} parent=1 // loop_header_branch
      %18 = sbr.rel (%p16) target = $region8
    $region5: #{tpu_custom_call.1} parent=1 // loop_body
      %s20 = ssub.s32 %s15, 1
      %s21 = ssub.s32 %s15, 2
      %s28 = sadd.s32 1, %s23
      %p29 = scmp.ge.s32.totalorder %s28, 1
      %s30 = scalar_select %p29, 0, %s28
      %s31 = sadd.s32 1, %s22
      %s32 = scalar_select %p29, %s31, %s22
      %p33 = scmp.ge.s32.totalorder %s32, 2
      %s34 = scalar_select %p33, 0, %s32
      %s35 = ssub.s32 %s22, %s34
      %s36 = ssub.s32 %s23, %s30
      %s37 = sor.u32 %s35, %s36
      %p38 = scmp.eq.s32.totalorder %s37, 0
      %s40 = sadd.s32 %s39, 1
      %s41 = scalar_select %p38, %s39, %s40
      %p44 = pneg %p38
      %p45 = scmp.eq.s32.totalorder %s15, 1
      %p46 = por %p44, %p45
      %p47 = scmp.ne.s32.totalorder %s39, %s42
      %p48 = scmp.eq.s32.totalorder %s15, 0
      %p49 = por %p47, %p48
      %p50 = scmp.ne.s32.totalorder %s39, %s42
      %p51 = scmp.eq.s32.totalorder %s20, 1
      %p52 = por %p50, %p51
      %p53 = scmp.ne.s32.totalorder %s42, %s43
      %p54 = scmp.eq.s32.totalorder %s20, 0
      %p55 = por %p53, %p54
      %p56 = scmp.ne.s32.totalorder %s42, %s43
      %p57 = scmp.eq.s32.totalorder %s21, 1
      %p58 = por %p56, %p57
      %p60 = scmp.ne.s32.totalorder %s43, %s59
      %p61 = scmp.eq.s32.totalorder %s21, 0
      %p62 = por %p60, %p61
      %s64 = sadd.s32 %s63, 1
      %p67 = scmp.eq.s32.totalorder %s15, 1
      %p68 = scmp.ne.s32.totalorder %s63, %s65
      %p69 = scmp.eq.s32.totalorder %s15, 0
      %p70 = por %p68, %p69
      %p71 = scmp.ne.s32.totalorder %s63, %s65
      %p72 = scmp.eq.s32.totalorder %s20, 1
      %p73 = por %p71, %p72
      %p74 = scmp.ne.s32.totalorder %s65, %s66
      %p75 = scmp.eq.s32.totalorder %s20, 0
      %p76 = por %p74, %p75
      %p77 = scmp.ne.s32.totalorder %s65, %s66
      %p78 = scmp.eq.s32.totalorder %s21, 1
      %p79 = por %p77, %p78
      %p81 = scmp.ne.s32.totalorder %s66, %s80
      %p82 = scmp.eq.s32.totalorder %s21, 0
      %p83 = por %p81, %p82
      %s84 = ssub.s32 %s22, %s34
      %s85 = ssub.s32 %s23, %s30
      %s86 = sor.u32 %s84, %s85
      %p87 = scmp.eq.s32.totalorder %s86, 0
      %s89 = sadd.s32 %s88, 1
      %s90 = scalar_select %p87, %s88, %s89
      %p93 = pneg %p87
      %p94 = scmp.eq.s32.totalorder %s15, 1
      %p95 = por %p93, %p94
      %p96 = scmp.ne.s32.totalorder %s88, %s91
      %p97 = scmp.eq.s32.totalorder %s15, 0
      %p98 = por %p96, %p97
      %p99 = scmp.ne.s32.totalorder %s88, %s91
      %p100 = scmp.eq.s32.totalorder %s20, 1
      %p101 = por %p99, %p100
      %p102 = scmp.ne.s32.totalorder %s91, %s92
      %p103 = scmp.eq.s32.totalorder %s20, 0
      %p104 = por %p102, %p103
      %p105 = scmp.ne.s32.totalorder %s91, %s92
      %p106 = scmp.eq.s32.totalorder %s21, 1
      %p107 = por %p105, %p106
      %p109 = scmp.ne.s32.totalorder %s92, %s108
      %p110 = scmp.eq.s32.totalorder %s21, 0
      %p111 = por %p109, %p110
      %p112 = scmp.le.s32.totalorder 1, %s15
      %p113 = scmp.lt.s32.totalorder %s15, 3
      %p114 = pnand %p112, %p113
      %p115 = pneg %p114
      // Predicated region
      $region9: #{tpu_custom_call.1} parent=5 // pred_check
        _
      $region10: #{tpu_custom_call.1} parent=5 // pred_check_branch
        %117 = sbr.rel (%p114) target = $region12
      $region11: #{tpu_custom_call.1} parent=5 // pred_region
        %s118 = ssub.s32 %s15, 1
        // Predicated region
        $region13: #{tpu_custom_call.1} parent=11 // pred_check
          %p119 = pneg %p76
        $region14: #{tpu_custom_call.1} parent=11 // pred_check_branch
          %121 = sbr.rel (%p119) target = $region16
        $region15: #{tpu_custom_call.1} parent=11 // pred_region
          %s123 = ssub.s32 256, 256
          %124 = vsyncadd [#allocation6], %s123
          %s125 = sshll.u32 [#allocation5], 4
          %s126 = int_to_ptr.vmem [resolvable:$true] %s125
          %131 = dma.hbm_to_vmem [thread:$0]  %s1, 256, %s126, [#allocation6], 128, 128, 8
        $region16: #{tpu_custom_call.1} parent=11 // pred_fallthru
          _
      $region12: #{tpu_custom_call.1} parent=5 // pred_fallthru
        _
      %p132 = scmp.lt.s32.totalorder %s15, 2
      // Predicated region
      $region17: #{tpu_custom_call.1} parent=5 // pred_check
        %p133 = pneg %p132
      $region18: #{tpu_custom_call.1} parent=5 // pred_check_branch
        %135 = sbr.rel (%p133) target = $region20
      $region19: #{tpu_custom_call.1} parent=5 // pred_region
        // Predicated region
        $region21: #{tpu_custom_call.1} parent=19 // pred_check
          %p136 = pneg %p49
        $region22: #{tpu_custom_call.1} parent=19 // pred_check_branch
          %138 = sbr.rel (%p136) target = $region24
        $region23: #{tpu_custom_call.1} parent=19 // pred_region
          %s139 = sand.u32 %s39, 1
          %s140 = scalar_lea.sflag [#allocation3], %s139
          %s141 = sand.u32 %s39, 1
          %s142 = smul.addr %s141, 64
          %s143 = scalar_lea.vmem [#allocation2], %s142
          %s144 = smul.u32 4, %s23
          %s146 = ssub.s32 1024, 1024
          %147 = vsyncadd %s140, %s146
          %s148 = smul.addr %s144, 2
          %s149 = smul.addr %s22, 8
          %s150 = sadd.s32 %s148, %s149
          %s151 = smul.addr %s150, 128
          %s152 = scalar_lea.hbm %s0, %s151
          %s153 = sshll.u32 %s143, 4
          %s154 = int_to_ptr.vmem [resolvable:$true] %s153
          %159 = dma.hbm_to_vmem [thread:$0]  %s152, 1024, %s154, %s140, 128, 128, 8
        $region24: #{tpu_custom_call.1} parent=19 // pred_fallthru
          _
      $region20: #{tpu_custom_call.1} parent=5 // pred_fallthru
        _
      %p160 = scmp.le.s32.totalorder 1, %s15
      %p161 = scmp.lt.s32.totalorder %s15, 3
      %p162 = pnand %p160, %p161
      %p163 = pneg %p162
      // Predicated region
      $region25: #{tpu_custom_call.1} parent=5 // pred_check
        _
      $region26: #{tpu_custom_call.1} parent=5 // pred_check_branch
        %165 = sbr.rel (%p162) target = $region28
      $region27: #{tpu_custom_call.1} parent=5 // pred_region
        %s166 = ssub.s32 %s15, 1
        %s167 = sand.u32 %s42, 1
        %s168 = scalar_lea.sflag [#allocation3], %s167
        %s169 = sand.u32 %s42, 1
        %s170 = smul.addr %s169, 64
        %s171 = scalar_lea.vmem [#allocation2], %s170
        // Predicated region
        $region29: #{tpu_custom_call.1} parent=27 // pred_check
          %p172 = pneg %p55
        $region30: #{tpu_custom_call.1} parent=27 // pred_check_branch
          %174 = sbr.rel (%p172) target = $region32
        $region31: #{tpu_custom_call.1} parent=27 // pred_region
          %175 = dma.done %s168, 1024
        $region32: #{tpu_custom_call.1} parent=27 // pred_fallthru
          _
        // Predicated region
        $region33: #{tpu_custom_call.1} parent=27 // pred_check
          %p176 = pneg %p76
        $region34: #{tpu_custom_call.1} parent=27 // pred_check_branch
          %178 = sbr.rel (%p176) target = $region36
        $region35: #{tpu_custom_call.1} parent=27 // pred_region
          %179 = dma.done [#allocation6], 256
        $region36: #{tpu_custom_call.1} parent=27 // pred_fallthru
          _
        %s180 = sand.u32 %s42, 1
        %s181 = scalar_lea.sflag [#allocation3], %s180
        %s182 = sand.u32 %s42, 1
        %s183 = smul.addr %s182, 64
        %s184 = scalar_lea.vmem [#allocation2], %s183
        %p185 = pneg %p55
        %p186 = pneg %p52
        %p187 = pneg %p76
        %p188 = pneg %p73
        %p189 = pneg %p104
        %p190 = pneg %p101
        %s191 = sand.u32 %s91, 1
        %s192 = scalar_lea.sflag [#allocation4], %s191
        %s193 = sand.u32 %s91, 1
        %s194 = smul.addr %s193, 64
        %s195 = scalar_lea.vmem [#allocation7], %s194
        %s196 = smul.u32 4, %s25
        %s197 = smul.u32 4, %s25
        %v198 = vld [vmem:[#allocation5] sm:$0xff]
        %v199 = vld [vmem:[#allocation5 + $0x8] sm:$0xff]
        %v200 = vld [vmem:[%s171] sm:$0xff]
        %v201 = vld [vmem:[%s171 + $0x8] sm:$0xff]
        %vm202 = vcmask 130048
        %v204 = vsel %vm202, %v198, 0
        %v207 = vsel %vm202, %v199, 0
        %209 = vmatprep.subr.mxu0 0.0
        %210 = vmatpush1.msra.mxu0 %v200
        %211 = vmatprep.subr.mxu0 0.0
        %212 = vmatpush1.msra.mxu0 %v201
        %213 = vmatprep.subr.mxu0 0.0
        %214 = vmatpush1.msra.mxu0 0.0
        %215 = vmatprep.subr.mxu0 0.0
        %216 = vmatpush1.msra.mxu0 0.0
        %217 = vmatprep.subr.mxu0 0.0
        %218 = vmatpush1.msra.mxu0 0.0
        %219 = vmatprep.subr.mxu0 0.0
        %220 = vmatpush1.msra.mxu0 0.0
        %221 = vmatprep.subr.mxu0 0.0
        %222 = vmatpush1.msra.mxu0 0.0
        %223 = vmatprep.subr.mxu0 0.0
        %224 = vmatpush1.msra.mxu0 0.0
        %225 = vmatprep.subr.mxu0 0.0
        %226 = vmatpush1.msra.mxu0 0.0
        %227 = vmatprep.subr.mxu0 0.0
        %228 = vmatpush1.msra.mxu0 0.0
        %229 = vmatprep.subr.mxu0 0.0
        %230 = vmatpush1.msra.mxu0 0.0
        %231 = vmatprep.subr.mxu0 0.0
        %232 = vmatpush1.msra.mxu0 0.0
        %233 = vmatprep.subr.mxu0 0.0
        %234 = vmatpush1.msra.mxu0 0.0
        %235 = vmatprep.subr.mxu0 0.0
        %236 = vmatpush1.msra.mxu0 0.0
        %237 = vmatprep.subr.mxu0 0.0
        %238 = vmatpush1.msra.mxu0 0.0
        %239 = vmatprep.subr.mxu0 0.0
        %240 = vmatpush1.msra.mxu0 0.0
        %241 = vmatprep.subr.mxu0 0.0
        %242 = vmatpush1.msra.mxu0 0.0
        %243 = vmatprep.subr.mxu0 0.0
        %244 = vmatpush1.msra.mxu0 0.0
        %245 = vmatprep.subr.mxu0 0.0
        %246 = vmatpush1.msra.mxu0 0.0
        %247 = vmatprep.subr.mxu0 0.0
        %248 = vmatpush1.msra.mxu0 0.0
        %249 = vmatprep.subr.mxu0 0.0
        %250 = vmatpush1.msra.mxu0 0.0
        %251 = vmatprep.subr.mxu0 0.0
        %252 = vmatpush1.msra.mxu0 0.0
        %253 = vmatprep.subr.mxu0 0.0
        %254 = vmatpush1.msra.mxu0 0.0
        %255 = vmatprep.subr.mxu0 0.0
        %256 = vmatpush1.msra.mxu0 0.0
        %257 = vmatprep.subr.mxu0 0.0
        %258 = vmatpush1.msra.mxu0 0.0
        %259 = vmatprep.subr.mxu0 0.0
        %260 = vmatpush1.msra.mxu0 0.0
        %261 = vmatprep.subr.mxu0 0.0
        %262 = vmatpush1.msra.mxu0 0.0
        %263 = vmatprep.subr.mxu0 0.0
        %264 = vmatpush1.msra.mxu0 0.0
        %265 = vmatprep.subr.mxu0 0.0
        %266 = vmatpush1.msra.mxu0 0.0
        %267 = vmatprep.subr.mxu0 0.0
        %268 = vmatpush1.msra.mxu0 0.0
        %269 = vmatprep.subr.mxu0 0.0
        %270 = vmatpush1.msra.mxu0 0.0
        %271 = vmatprep.subr.mxu0 0.0
        %272 = vmatpush1.msra.mxu0 0.0
        %273 = vmatprep.mubr.f32.mxu0 0.0
        %274 = vmatmul.mubr.f32.gmra.mrb[0].mxu0 %v204
        %v275 = vpop.f32.mrb[0].mxu0
        %v276 = vadd.f32 0.0, %v275
        %v277 = vpop.f32.mrb[0].mxu0
        %278 = vmatprep.mubr.f32.mxu0 0.0
        %279 = vmatmul.mubr.f32.gmra.mrb[0].mxu0 %v207
        %v280 = vpop.f32.mrb[0].mxu0
        %v281 = vadd.f32 0.0, %v280
        %v282 = vpop.f32.mrb[0].mxu0
        %283 = vdwg.mxu0
        %284 = vst.msk [vmem:[%s195] sm:$0xff] %vm202, %v276
        %285 = vst.msk [vmem:[%s195 + $0x8] sm:$0xff] %vm202, %v281
        %v286 = vld [vmem:[#allocation5] sm:$0xff]
        %v287 = vld [vmem:[#allocation5 + $0x8] sm:$0xff]
        %s288 = scalar_lea.vmem %s171, 16 [#allocation2]
        %v289 = vld [vmem:[%s288] sm:$0xff]
        %v290 = vld [vmem:[%s288 + $0x8] sm:$0xff]
        %v292 = vsel %vm202, %v286, 0
        %v295 = vsel %vm202, %v287, 0
        %297 = vmatprep.subr.mxu0 0.0
        %298 = vmatpush1.msra.mxu0 %v289
        %299 = vmatprep.subr.mxu0 0.0
        %300 = vmatpush1.msra.mxu0 %v290
        %301 = vmatprep.subr.mxu0 0.0
        %302 = vmatpush1.msra.mxu0 0.0
        %303 = vmatprep.subr.mxu0 0.0
        %304 = vmatpush1.msra.mxu0 0.0
        %305 = vmatprep.subr.mxu0 0.0
        %306 = vmatpush1.msra.mxu0 0.0
        %307 = vmatprep.subr.mxu0 0.0
        %308 = vmatpush1.msra.mxu0 0.0
        %309 = vmatprep.subr.mxu0 0.0
        %310 = vmatpush1.msra.mxu0 0.0
        %311 = vmatprep.subr.mxu0 0.0
        %312 = vmatpush1.msra.mxu0 0.0
        %313 = vmatprep.subr.mxu0 0.0
        %314 = vmatpush1.msra.mxu0 0.0
        %315 = vmatprep.subr.mxu0 0.0
        %316 = vmatpush1.msra.mxu0 0.0
        %317 = vmatprep.subr.mxu0 0.0
        %318 = vmatpush1.msra.mxu0 0.0
        %319 = vmatprep.subr.mxu0 0.0
        %320 = vmatpush1.msra.mxu0 0.0
        %321 = vmatprep.subr.mxu0 0.0
        %322 = vmatpush1.msra.mxu0 0.0
        %323 = vmatprep.subr.mxu0 0.0
        %324 = vmatpush1.msra.mxu0 0.0
        %325 = vmatprep.subr.mxu0 0.0
        %326 = vmatpush1.msra.mxu0 0.0
        %327 = vmatprep.subr.mxu0 0.0
        %328 = vmatpush1.msra.mxu0 0.0
        %329 = vmatprep.subr.mxu0 0.0
        %330 = vmatpush1.msra.mxu0 0.0
        %331 = vmatprep.subr.mxu0 0.0
        %332 = vmatpush1.msra.mxu0 0.0
        %333 = vmatprep.subr.mxu0 0.0
        %334 = vmatpush1.msra.mxu0 0.0
        %335 = vmatprep.subr.mxu0 0.0
        %336 = vmatpush1.msra.mxu0 0.0
        %337 = vmatprep.subr.mxu0 0.0
        %338 = vmatpush1.msra.mxu0 0.0
        %339 = vmatprep.subr.mxu0 0.0
        %340 = vmatpush1.msra.mxu0 0.0
        %341 = vmatprep.subr.mxu0 0.0
        %342 = vmatpush1.msra.mxu0 0.0
        %343 = vmatprep.subr.mxu0 0.0
        %344 = vmatpush1.msra.mxu0 0.0
        %345 = vmatprep.subr.mxu0 0.0
        %346 = vmatpush1.msra.mxu0 0.0
        %347 = vmatprep.subr.mxu0 0.0
        %348 = vmatpush1.msra.mxu0 0.0
        %349 = vmatprep.subr.mxu0 0.0
        %350 = vmatpush1.msra.mxu0 0.0
        %351 = vmatprep.subr.mxu0 0.0
        %352 = vmatpush1.msra.mxu0 0.0
        %353 = vmatprep.subr.mxu0 0.0
        %354 = vmatpush1.msra.mxu0 0.0
        %355 = vmatprep.subr.mxu0 0.0
        %356 = vmatpush1.msra.mxu0 0.0
        %357 = vmatprep.subr.mxu0 0.0
        %358 = vmatpush1.msra.mxu0 0.0
        %359 = vmatprep.subr.mxu0 0.0
        %360 = vmatpush1.msra.mxu0 0.0
        %361 = vmatprep.mubr.f32.mxu0 0.0
        %362 = vmatmul.mubr.f32.gmra.mrb[0].mxu0 %v292
        %v363 = vpop.f32.mrb[0].mxu0
        %v364 = vadd.f32 0.0, %v363
        %v365 = vpop.f32.mrb[0].mxu0
        %366 = vmatprep.mubr.f32.mxu0 0.0
        %367 = vmatmul.mubr.f32.gmra.mrb[0].mxu0 %v295
        %v368 = vpop.f32.mrb[0].mxu0
        %v369 = vadd.f32 0.0, %v368
        %v370 = vpop.f32.mrb[0].mxu0
        %371 = vdwg.mxu0
        %s372 = scalar_lea.vmem %s195, 16 [#allocation7]
        %373 = vst.msk [vmem:[%s372] sm:$0xff] %vm202, %v364
        %374 = vst.msk [vmem:[%s372 + $0x8] sm:$0xff] %vm202, %v369
        %v375 = vld [vmem:[#allocation5] sm:$0xff]
        %v376 = vld [vmem:[#allocation5 + $0x8] sm:$0xff]
        %s377 = scalar_lea.vmem %s171, 32 [#allocation2]
        %v378 = vld [vmem:[%s377] sm:$0xff]
        %v379 = vld [vmem:[%s377 + $0x8] sm:$0xff]
        %v381 = vsel %vm202, %v375, 0
        %v384 = vsel %vm202, %v376, 0
        %386 = vmatprep.subr.mxu0 0.0
        %387 = vmatpush1.msra.mxu0 %v378
        %388 = vmatprep.subr.mxu0 0.0
        %389 = vmatpush1.msra.mxu0 %v379
        %390 = vmatprep.subr.mxu0 0.0
        %391 = vmatpush1.msra.mxu0 0.0
        %392 = vmatprep.subr.mxu0 0.0
        %393 = vmatpush1.msra.mxu0 0.0
        %394 = vmatprep.subr.mxu0 0.0
        %395 = vmatpush1.msra.mxu0 0.0
        %396 = vmatprep.subr.mxu0 0.0
        %397 = vmatpush1.msra.mxu0 0.0
        %398 = vmatprep.subr.mxu0 0.0
        %399 = vmatpush1.msra.mxu0 0.0
        %400 = vmatprep.subr.mxu0 0.0
        %401 = vmatpush1.msra.mxu0 0.0
        %402 = vmatprep.subr.mxu0 0.0
        %403 = vmatpush1.msra.mxu0 0.0
        %404 = vmatprep.subr.mxu0 0.0
        %405 = vmatpush1.msra.mxu0 0.0
        %406 = vmatprep.subr.mxu0 0.0
        %407 = vmatpush1.msra.mxu0 0.0
        %408 = vmatprep.subr.mxu0 0.0
        %409 = vmatpush1.msra.mxu0 0.0
        %410 = vmatprep.subr.mxu0 0.0
        %411 = vmatpush1.msra.mxu0 0.0
        %412 = vmatprep.subr.mxu0 0.0
        %413 = vmatpush1.msra.mxu0 0.0
        %414 = vmatprep.subr.mxu0 0.0
        %415 = vmatpush1.msra.mxu0 0.0
        %416 = vmatprep.subr.mxu0 0.0
        %417 = vmatpush1.msra.mxu0 0.0
        %418 = vmatprep.subr.mxu0 0.0
        %419 = vmatpush1.msra.mxu0 0.0
        %420 = vmatprep.subr.mxu0 0.0
        %421 = vmatpush1.msra.mxu0 0.0
        %422 = vmatprep.subr.mxu0 0.0
        %423 = vmatpush1.msra.mxu0 0.0
        %424 = vmatprep.subr.mxu0 0.0
        %425 = vmatpush1.msra.mxu0 0.0
        %426 = vmatprep.subr.mxu0 0.0
        %427 = vmatpush1.msra.mxu0 0.0
        %428 = vmatprep.subr.mxu0 0.0
        %429 = vmatpush1.msra.mxu0 0.0
        %430 = vmatprep.subr.mxu0 0.0
        %431 = vmatpush1.msra.mxu0 0.0
        %432 = vmatprep.subr.mxu0 0.0
        %433 = vmatpush1.msra.mxu0 0.0
        %434 = vmatprep.subr.mxu0 0.0
        %435 = vmatpush1.msra.mxu0 0.0
        %436 = vmatprep.subr.mxu0 0.0
        %437 = vmatpush1.msra.mxu0 0.0
        %438 = vmatprep.subr.mxu0 0.0
        %439 = vmatpush1.msra.mxu0 0.0
        %440 = vmatprep.subr.mxu0 0.0
        %441 = vmatpush1.msra.mxu0 0.0
        %442 = vmatprep.subr.mxu0 0.0
        %443 = vmatpush1.msra.mxu0 0.0
        %444 = vmatprep.subr.mxu0 0.0
        %445 = vmatpush1.msra.mxu0 0.0
        %446 = vmatprep.subr.mxu0 0.0
        %447 = vmatpush1.msra.mxu0 0.0
        %448 = vmatprep.subr.mxu0 0.0
        %449 = vmatpush1.msra.mxu0 0.0
        %450 = vmatprep.mubr.f32.mxu0 0.0
        %451 = vmatmul.mubr.f32.gmra.mrb[0].mxu0 %v381
        %v452 = vpop.f32.mrb[0].mxu0
        %v453 = vadd.f32 0.0, %v452
        %v454 = vpop.f32.mrb[0].mxu0
        %455 = vmatprep.mubr.f32.mxu0 0.0
        %456 = vmatmul.mubr.f32.gmra.mrb[0].mxu0 %v384
        %v457 = vpop.f32.mrb[0].mxu0
        %v458 = vadd.f32 0.0, %v457
        %v459 = vpop.f32.mrb[0].mxu0
        %460 = vdwg.mxu0
        %s461 = scalar_lea.vmem %s195, 32 [#allocation7]
        %462 = vst.msk [vmem:[%s461] sm:$0xff] %vm202, %v453
        %463 = vst.msk [vmem:[%s461 + $0x8] sm:$0xff] %vm202, %v458
        %v464 = vld [vmem:[#allocation5] sm:$0xff]
        %v465 = vld [vmem:[#allocation5 + $0x8] sm:$0xff]
        %s466 = scalar_lea.vmem %s171, 48 [#allocation2]
        %v467 = vld [vmem:[%s466] sm:$0xff]
        %v468 = vld [vmem:[%s466 + $0x8] sm:$0xff]
        %v470 = vsel %vm202, %v464, 0
        %v473 = vsel %vm202, %v465, 0
        %475 = vmatprep.subr.mxu0 0.0
        %476 = vmatpush1.msra.mxu0 %v467
        %477 = vmatprep.subr.mxu0 0.0
        %478 = vmatpush1.msra.mxu0 %v468
        %479 = vmatprep.subr.mxu0 0.0
        %480 = vmatpush1.msra.mxu0 0.0
        %481 = vmatprep.subr.mxu0 0.0
        %482 = vmatpush1.msra.mxu0 0.0
        %483 = vmatprep.subr.mxu0 0.0
        %484 = vmatpush1.msra.mxu0 0.0
        %485 = vmatprep.subr.mxu0 0.0
        %486 = vmatpush1.msra.mxu0 0.0
        %487 = vmatprep.subr.mxu0 0.0
        %488 = vmatpush1.msra.mxu0 0.0
        %489 = vmatprep.subr.mxu0 0.0
        %490 = vmatpush1.msra.mxu0 0.0
        %491 = vmatprep.subr.mxu0 0.0
        %492 = vmatpush1.msra.mxu0 0.0
        %493 = vmatprep.subr.mxu0 0.0
        %494 = vmatpush1.msra.mxu0 0.0
        %495 = vmatprep.subr.mxu0 0.0
        %496 = vmatpush1.msra.mxu0 0.0
        %497 = vmatprep.subr.mxu0 0.0
        %498 = vmatpush1.msra.mxu0 0.0
        %499 = vmatprep.subr.mxu0 0.0
        %500 = vmatpush1.msra.mxu0 0.0
        %501 = vmatprep.subr.mxu0 0.0
        %502 = vmatpush1.msra.mxu0 0.0
        %503 = vmatprep.subr.mxu0 0.0
        %504 = vmatpush1.msra.mxu0 0.0
        %505 = vmatprep.subr.mxu0 0.0
        %506 = vmatpush1.msra.mxu0 0.0
        %507 = vmatprep.subr.mxu0 0.0
        %508 = vmatpush1.msra.mxu0 0.0
        %509 = vmatprep.subr.mxu0 0.0
        %510 = vmatpush1.msra.mxu0 0.0
        %511 = vmatprep.subr.mxu0 0.0
        %512 = vmatpush1.msra.mxu0 0.0
        %513 = vmatprep.subr.mxu0 0.0
        %514 = vmatpush1.msra.mxu0 0.0
        %515 = vmatprep.subr.mxu0 0.0
        %516 = vmatpush1.msra.mxu0 0.0
        %517 = vmatprep.subr.mxu0 0.0
        %518 = vmatpush1.msra.mxu0 0.0
        %519 = vmatprep.subr.mxu0 0.0
        %520 = vmatpush1.msra.mxu0 0.0
        %521 = vmatprep.subr.mxu0 0.0
        %522 = vmatpush1.msra.mxu0 0.0
        %523 = vmatprep.subr.mxu0 0.0
        %524 = vmatpush1.msra.mxu0 0.0
        %525 = vmatprep.subr.mxu0 0.0
        %526 = vmatpush1.msra.mxu0 0.0
        %527 = vmatprep.subr.mxu0 0.0
        %528 = vmatpush1.msra.mxu0 0.0
        %529 = vmatprep.subr.mxu0 0.0
        %530 = vmatpush1.msra.mxu0 0.0
        %531 = vmatprep.subr.mxu0 0.0
        %532 = vmatpush1.msra.mxu0 0.0
        %533 = vmatprep.subr.mxu0 0.0
        %534 = vmatpush1.msra.mxu0 0.0
        %535 = vmatprep.subr.mxu0 0.0
        %536 = vmatpush1.msra.mxu0 0.0
        %537 = vmatprep.subr.mxu0 0.0
        %538 = vmatpush1.msra.mxu0 0.0
        %539 = vmatprep.mubr.f32.mxu0 0.0
        %540 = vmatmul.mubr.f32.gmra.mrb[0].mxu0 %v470
        %v541 = vpop.f32.mrb[0].mxu0
        %v542 = vadd.f32 0.0, %v541
        %v543 = vpop.f32.mrb[0].mxu0
        %544 = vmatprep.mubr.f32.mxu0 0.0
        %545 = vmatmul.mubr.f32.gmra.mrb[0].mxu0 %v473
        %v546 = vpop.f32.mrb[0].mxu0
        %v547 = vadd.f32 0.0, %v546
        %v548 = vpop.f32.mrb[0].mxu0
        %549 = vdwg.mxu0
        %s550 = scalar_lea.vmem %s195, 48 [#allocation7]
        %551 = vst.msk [vmem:[%s550] sm:$0xff] %vm202, %v542
        %552 = vst.msk [vmem:[%s550 + $0x8] sm:$0xff] %vm202, %v547
        %s553 = sand.u32 %s91, 1
        %s554 = scalar_lea.sflag [#allocation4], %s553
        %s555 = sand.u32 %s91, 1
        %s556 = smul.addr %s555, 64
        %s557 = scalar_lea.vmem [#allocation7], %s556
        // Predicated region
        $region37: #{tpu_custom_call.1} parent=27 // pred_check
          %p558 = pneg %p101
        $region38: #{tpu_custom_call.1} parent=27 // pred_check_branch
          %560 = sbr.rel (%p558) target = $region40
        $region39: #{tpu_custom_call.1} parent=27 // pred_region
          %s561 = smul.u32 4, %s25
          %s563 = ssub.s32 1024, 1024
          %564 = vsyncadd %s554, %s563
          %s565 = smul.addr %s561, 2
          %s566 = smul.addr %s24, 8
          %s567 = sadd.s32 %s565, %s566
          %s568 = smul.addr %s567, 128
          %s569 = scalar_lea.hbm %s2, %s568
          %s570 = sshll.u32 %s557, 4
          %s571 = int_to_ptr.vmem [resolvable:$true] %s570
          %576 = dma.vmem_to_hbm [thread:$0]  %s571, 1024, %s569, %s554, 128, 128, 8
        $region40: #{tpu_custom_call.1} parent=27 // pred_fallthru
          _
      $region28: #{tpu_custom_call.1} parent=5 // pred_fallthru
        _
      %p577 = scmp.le.s32.totalorder 2, %s15
      // Predicated region
      $region41: #{tpu_custom_call.1} parent=5 // pred_check
        %p578 = pneg %p577
      $region42: #{tpu_custom_call.1} parent=5 // pred_check_branch
        %580 = sbr.rel (%p578) target = $region44
      $region43: #{tpu_custom_call.1} parent=5 // pred_region
        %s581 = ssub.s32 %s15, 2
        // Predicated region
        $region45: #{tpu_custom_call.1} parent=43 // pred_check
          %p582 = pneg %p107
        $region46: #{tpu_custom_call.1} parent=43 // pred_check_branch
          %584 = sbr.rel (%p582) target = $region48
        $region47: #{tpu_custom_call.1} parent=43 // pred_region
          %s585 = sand.u32 %s92, 1
          %s586 = scalar_lea.sflag [#allocation4], %s585
          %s587 = sand.u32 %s92, 1
          %s588 = smul.addr %s587, 64
          %s589 = scalar_lea.vmem [#allocation7], %s588
          %590 = dma.done %s586, 1024
        $region48: #{tpu_custom_call.1} parent=43 // pred_fallthru
          _
      $region44: #{tpu_custom_call.1} parent=5 // pred_fallthru
        _
    $region6: #{tpu_custom_call.1} parent=1 // loop_footer
      %s19 = sadd.s32 1, %s15
    $region7: #{tpu_custom_call.1} parent=1 // loop_footer_branch
      %14 = sbr.rel target = $region3
    $region8: #{tpu_custom_call.1} parent=1 // loop_exit
      _
    %591 = vsyncpa [#allocation3], 1
    %s592 = scalar_lea.sflag [#allocation3], 1
    %593 = vsyncpa %s592, 1
    %594 = vsyncpa [#allocation6], 1
    %595 = vsyncpa [#allocation4], 1
    %s596 = scalar_lea.sflag [#allocation4], 1
    %597 = vsyncpa %s596, 1

</llo_original>
